<compile_context>
chip_gen: v7x
topology: tpu7x:2x2x1
jax: 0.10.0
libtpu: 0.0.40
codegen_flags: <defaults>
</compile_context>

<pallas_src>
import jax
import jax.numpy as jnp
from jax import lax
from jax.experimental import pallas as pl
from jax.experimental.pallas import tpu as pltpu

PACK = 2  # output pixels packed per kernel row -> output last dim = PACK * 64 = 128 lanes


# ---------------------------------------------------------------------------
# Pallas kernels
# ---------------------------------------------------------------------------
def _conv_bias_relu_kernel(x_ref, w_ref, b_ref, o_ref):
    # x_ref: (TM, pack*K) bf16, w_ref: (pack*K, pack*Cout) bf16, b_ref: (1, pack*Cout) f32
    acc = jnp.dot(x_ref[...], w_ref[...], preferred_element_type=jnp.float32)
    o_ref[...] = jnp.maximum(acc + b_ref[...], 0.0).astype(o_ref.dtype)


def _maxpool3x3s2_kernel(x_ref, o_ref):
    # x_ref: (4, Hp+1, Wp+1, C) parity planes with
    #        x_ref[ph*2 + pw, i, j, c] == padded_input[2*i + ph, 2*j + pw, c]
    # o_ref: (1, Hp, Wp, C)
    _, Hp, Wp, _ = o_ref.shape
    out = None
    for dh in range(3):
        ph, oh = dh % 2, dh // 2
        for dw in range(3):
            pw, ow = dw % 2, dw // 2
            win = x_ref[ph * 2 + pw, oh:oh + Hp, ow:ow + Wp, :]
            out = win if out is None else jnp.maximum(out, win)
    o_ref[0] = out.astype(o_ref.dtype)


# ---------------------------------------------------------------------------
# Wrappers
# ---------------------------------------------------------------------------
def _im2col(x_nhwc, ksize, stride, pad):
    N, H, W, C = x_nhwc.shape
    xp = jnp.pad(x_nhwc, ((0, 0), (pad, pad), (pad, pad), (0, 0)))
    Ho = (H + 2 * pad - ksize) // stride + 1
    Wo = (W + 2 * pad - ksize) // stride + 1
    cols = []
    for kh in range(ksize):
        for kw in range(ksize):
            cols.append(xp[:, kh:kh + stride * Ho:stride, kw:kw + stride * Wo:stride, :])
    patches = jnp.concatenate(cols, axis=-1)                    # (N, Ho, Wo, k*k*C)
    # TODO(synk): a fully fused halo-DMA conv (no materialized im2col) would cut HBM reads further.
    return patches.reshape(N * Ho * Wo, ksize * ksize * C), (N, Ho, Wo)


def _pick_row_tile(m_rows, max_tile=512):
    # Largest tile (multiple of 8, dividing m_rows) that still leaves >= 2 grid steps
    # so both TensorCores on v7x get work.
    for t in (512, 256, 128, 64, 32, 16, 8):
        if t <= max_tile and m_rows % t == 0 and m_rows // t >= 2:
            return t
    return m_rows


def conv7x7_bn_relu_pallas(x_nhwc, params, eps=1e-5):
    """7x7 conv (stride 2, pad 3) + BatchNorm (inference, folded) + ReLU via one matmul kernel."""
    w, b, gamma, beta, mean, var = params                      # w: (Cout, Cin, 7, 7)
    cout, cin, ksize, _ = w.shape
    patches, (N, Ho, Wo) = _im2col(x_nhwc, ksize, 2, 3)
    M, K = patches.shape

    # Fold BN + conv bias:  y = ((conv + b) - mean) * gamma / sqrt(var + eps) + beta
    scale = gamma / jnp.sqrt(var + eps)
    bias = scale * (b - mean) + beta
    w_mat = jnp.transpose(w, (2, 3, 1, 0)).reshape(K, cout) * scale[None, :]

    # Pack PACK consecutive output pixels per kernel row (block-diagonal RHS) so the
    # output block's last dim is a full multiple of 128 lanes -> unmasked stores.
    pack = PACK if (M % PACK == 0 and (PACK * cout) % 128 == 0) else 1
    w_blk = jnp.zeros((pack * K, pack * cout), jnp.float32)
    for p in range(pack):
        w_blk = w_blk.at[p * K:(p + 1) * K, p * cout:(p + 1) * cout].set(w_mat)

    lhs = patches.reshape(M // pack, pack * K).astype(jnp.bfloat16)
    rhs = w_blk.astype(jnp.bfloat16)
    bias_row = jnp.tile(bias, pack).reshape(1, pack * cout).astype(jnp.float32)

    m2, k2, n2 = M // pack, pack * K, pack * cout
    tm = _pick_row_tile(m2)

    out = pl.pallas_call(
        _conv_bias_relu_kernel,
        out_shape=jax.ShapeDtypeStruct((m2, n2), jnp.float32),
        grid_spec=pl.GridSpec(
            grid=(m2 // tm,),
            in_specs=[pl.BlockSpec((tm, k2), lambda i: (i, 0)),
                      pl.BlockSpec((k2, n2), lambda i: (0, 0)),
                      pl.BlockSpec((1, n2), lambda i: (0, 0))],
            out_specs=pl.BlockSpec((tm, n2), lambda i: (i, 0)),
        ),
        compiler_params=pltpu.CompilerParams(dimension_semantics=("parallel",)),
    )(lhs, rhs, bias_row)

    return out.reshape(M, cout).reshape(N, Ho, Wo, cout)


def maxpool3x3s2_pallas(y_nhwc):
    """MaxPool2d(kernel=3, stride=2, pad=1) on NHWC input."""
    N, Ho, Wo, C = y_nhwc.shape
    Hp = (Ho + 2 - 3) // 2 + 1
    Wp = (Wo + 2 - 3) // 2 + 1
    He, We = Hp + 1, Wp + 1

    yp = jnp.pad(y_nhwc,
                 ((0, 0), (1, 2 * Hp + 1 - Ho), (1, 2 * Wp + 1 - Wo), (0, 0)),
                 constant_values=-jnp.inf)                      # (N, 2*He, 2*We, C)
    # parity planes: planes[n*4 + ph*2 + pw, i, j, c] = yp[n, 2i+ph, 2j+pw, c]
    planes = yp.reshape(N, He, 2, We, 2, C).transpose(0, 2, 4, 1, 3, 5)
    planes = planes.reshape(N * 4, He, We, C)

    return pl.pallas_call(
        _maxpool3x3s2_kernel,
        out_shape=jax.ShapeDtypeStruct((N, Hp, Wp, C), jnp.float32),
        grid_spec=pl.GridSpec(
            grid=(N,),
            in_specs=[pl.BlockSpec((4, He, We, C), lambda n: (n, 0, 0, 0))],
            out_specs=pl.BlockSpec((1, Hp, Wp, C), lambda n: (n, 0, 0, 0)),
        ),
        compiler_params=pltpu.CompilerParams(dimension_semantics=("parallel",)),
    )(planes)


def resnet_front_forward(x_nchw, params):
    """Pallas implementation of ResNet_front.forward (BatchNorm in inference mode)."""
    x = jnp.transpose(x_nchw, (0, 2, 3, 1))                    # NCHW -> NHWC
    y = conv7x7_bn_relu_pallas(x, params)                      # (N, Ho, Wo, 64)
    p = maxpool3x3s2_pallas(y)                                 # (N, Hp, Wp, 64)
    return jnp.transpose(p, (0, 3, 1, 2))                      # NHWC -> NCHW


# ---------------------------------------------------------------------------
# Pure-JAX reference (for correctness check)
# ---------------------------------------------------------------------------
def resnet_front_ref(x_nchw, params, eps=1e-5):
    w, b, gamma, beta, mean, var = params
    y = lax.conv_general_dilated(
        x_nchw, w, (2, 2), ((3, 3), (3, 3)),
        dimension_numbers=("NCHW", "OIHW", "NCHW"),
        precision=lax.Precision.HIGHEST)
    y = y + b.reshape(1, -1, 1, 1)
    y = (y - mean.reshape(1, -1, 1, 1)) / jnp.sqrt(var.reshape(1, -1, 1, 1) + eps)
    y = y * gamma.reshape(1, -1, 1, 1) + beta.reshape(1, -1, 1, 1)
    y = jnp.maximum(y, 0.0)
    y = lax.reduce_window(y, -jnp.inf, lax.max,
                          window_dimensions=(1, 1, 3, 3),
                          window_strides=(1, 1, 2, 2),
                          padding=((0, 0), (0, 0), (1, 1), (1, 1)))
    return y


# ---------------------------------------------------------------------------
# Deterministic parameters (conv weight/bias + BN gamma/beta/running mean/var)
# ---------------------------------------------------------------------------
def make_params(key, cin=3, cout=64):
    k1, k2, k3, k4, k5, k6 = jax.random.split(key, 6)
    w = jax.random.normal(k1, (cout, cin, 7, 7), jnp.float32) * 0.08
    b = jax.random.normal(k2, (cout,), jnp.float32) * 0.05
    gamma = 1.0 + 0.1 * jax.random.normal(k3, (cout,), jnp.float32)
    beta = 0.1 * jax.random.normal(k4, (cout,), jnp.float32)
    mean = 0.1 * jax.random.normal(k5, (cout,), jnp.float32)
    var = 1.0 + 0.1 * jnp.abs(jax.random.normal(k6, (cout,), jnp.float32))
    return (w, b, gamma, beta, mean, var)


if __name__ == "__main__":
    root = jax.random.PRNGKey(0)
    kx, kp = jax.random.split(root)

    x = jax.random.normal(kx, (2, 3, 32, 32), jnp.float32)     # NCHW, Cin=3 as the module requires
    params = make_params(kp)

    out = jax.block_until_ready(resnet_front_forward(x, params))
    ref = resnet_front_ref(x, params)

    assert out.shape == (2, 64, 8, 8), out.shape
    assert ref.shape == (2, 64, 8, 8), ref.shape
    max_err = float(jnp.max(jnp.abs(out - ref)))
    # bf16 matmul inputs with f32 accumulation vs. an f32 (HIGHEST precision) reference.
    assert jnp.allclose(out, ref, atol=5e-2, rtol=5e-2), f"mismatch, max abs err = {max_err}"

    print("KERNEL_OK")
</pallas_src>

<mosaic_0001>
module attributes {stable_mosaic.version = 11 : i64} {
  func.func @_conv_bias_relu_kernel(%arg0: i32, %arg1: memref<128x294xbf16, #tpu.memory_space<vmem>>, %arg2: memref<294x128xbf16, #tpu.memory_space<vmem>>, %arg3: memref<1x128xf32, #tpu.memory_space<vmem>>, %arg4: memref<128x128xf32, #tpu.memory_space<vmem>>) attributes {dimension_semantics = [#tpu.dimension_semantics<parallel>], iteration_bounds = array<i64: 2>, scalar_prefetch = 0 : i64, scratch_operands = 0 : i64, tpu.core_type = #tpu.core_type<tc>, window_params = [{transform_indices = @transform_0, window_bounds = array<i64: 128, 294>}, {pipeline_mode = #tpu.pipeline_mode<synchronous>, transform_indices = @transform_1, window_bounds = array<i64: 294, 128>}, {pipeline_mode = #tpu.pipeline_mode<synchronous>, transform_indices = @transform_2, window_bounds = array<i64: 1, 128>}, {transform_indices = @transform_3, window_bounds = array<i64: 128, 128>}]} {
    %c0 = arith.constant 0 : index
    %c0_0 = arith.constant 0 : index
    %0 = vector.load %arg1[%c0, %c0_0] : memref<128x294xbf16, #tpu.memory_space<vmem>>, vector<128x294xbf16>
    %c0_1 = arith.constant 0 : index
    %c0_2 = arith.constant 0 : index
    %1 = vector.load %arg2[%c0_1, %c0_2] : memref<294x128xbf16, #tpu.memory_space<vmem>>, vector<294x128xbf16>
    %cst = arith.constant dense<0.000000e+00> : vector<128x128xf32>
    %2 = tpu.matmul %0, %1, %cst {dimension_numbers = #tpu.dot_dimension_numbers<[1], [0], [0], [1], [0, 0, 1, 1], [], []>} : vector<128x294xbf16>, vector<294x128xbf16>, vector<128x128xf32> -> vector<128x128xf32>
    %c0_3 = arith.constant 0 : index
    %c0_4 = arith.constant 0 : index
    %3 = vector.load %arg3[%c0_3, %c0_4] : memref<1x128xf32, #tpu.memory_space<vmem>>, vector<1x128xf32>
    %4 = vector.broadcast %3 : vector<1x128xf32> to vector<128x128xf32>
    %5 = arith.addf %2, %4 : vector<128x128xf32>
    %cst_5 = arith.constant 0.000000e+00 : f32
    %6 = vector.broadcast %cst_5 : f32 to vector<128x128xf32>
    %7 = arith.maximumf %5, %6 : vector<128x128xf32>
    %c0_6 = arith.constant 0 : index
    %c0_7 = arith.constant 0 : index
    %8 = vector.load %arg4[%c0_6, %c0_7] : memref<128x128xf32, #tpu.memory_space<vmem>>, vector<128x128xf32>
    tpu.vector_store %arg4[%c0_6, %c0_7], %7 {strides = array<i32>} : memref<128x128xf32, #tpu.memory_space<vmem>>, vector<128x128xf32>,
    return
  }
  func.func @transform_0(%arg0: i32) -> (i32, i32) {
    %c0_i32 = arith.constant 0 : i32
    %c0_i32_0 = arith.constant 0 : i32
    return %arg0, %c0_i32 : i32, i32
  }
  func.func @transform_1(%arg0: i32) -> (i32, i32) {
    %c0_i32 = arith.constant 0 : i32
    %c0_i32_0 = arith.constant 0 : i32
    %c0_i32_1 = arith.constant 0 : i32
    return %c0_i32, %c0_i32_0 : i32, i32
  }
  func.func @transform_2(%arg0: i32) -> (i32, i32) {
    %c0_i32 = arith.constant 0 : i32
    %c0_i32_0 = arith.constant 0 : i32
    %c0_i32_1 = arith.constant 0 : i32
    return %c0_i32, %c0_i32_0 : i32, i32
  }
  func.func @transform_3(%arg0: i32) -> (i32, i32) {
    %c0_i32 = arith.constant 0 : i32
    %c0_i32_0 = arith.constant 0 : i32
    return %arg0, %c0_i32 : i32, i32
  }
}

</mosaic_0001>

<llo_original>
// kernel: tpu_custom_call.1
$region0: #{tpu_custom_call.1}
  #allocation0 [shape = 'u32[]', space=smem, size = 0x4, offset = 0x4, fixed_abs, tag = 'smem constant byte address 0x4 - core index']
  #allocation1 [shape = 'u32[144,128]{1,0:T(1,128)}', space=vmem, size = 0x12000, scoped, tag = 'internal scratch']
  %s0 = inlined_call_operand.vmem [shape: bf16[256,294], index: 0, kind: input, shape index: {}]
  %s1 = inlined_call_operand.vmem [shape: bf16[294,128], index: 1, kind: input, shape index: {}]
  %s2 = inlined_call_operand.vmem [shape: f32[1,128], index: 2, kind: input, shape index: {}]
  %s3 = inlined_call_operand.hbm [shape: f32[256,128], index: 3, kind: output, shape index: {}]
  %s4 = sld [smem:[#allocation0]]
  $region45: #{tpu_custom_call.1} parent=0
    _
  %s6 = ssub.s32 1, %s4
  %s7 = scalar_select 0, %s6, %s4
  $region1: #{tpu_custom_call.1} parent=0
    #allocation2 [shape = 'u8[131072]{0}', space=vmem, size = 0x20000, scoped, tag = 'output window, operand 0']
    #allocation3 [shape = 's32[2]{0}', space=sflag, size = 0x8, scoped, tag = 'scoped memory for tpu_custom_call.1']
    %8 = vsyncpa [#allocation3], 0
    %s9 = scalar_lea.sflag [#allocation3], 1
    %10 = vsyncpa %s9, 0
    loop: start=0, step=1, limit=4
    $region2: #{tpu_custom_call.1} parent=1 // loop_pre_header
      _
    $region3: #{tpu_custom_call.1} parent=1 // loop_header
      %s12 = sphi 0, %s16
      %p13 = scmp.ge.s32.totalorder %s12, 4
      %s22 = sphi 0, %s24
      %s25 = sphi 0, %s22
      %s26 = sphi 0, %s25
      %s42 = sphi 0, %s26
      %s46 = sphi 0, %s46
      %s48 = sphi 0, %s46
      %s49 = sphi 0, %s48
      %s63 = sphi 0, %s49
      %s67 = sphi 0, %s67
      %s69 = sphi 0, %s67
      %s70 = sphi 0, %s69
      %s84 = sphi 0, %s70
      %s90 = sphi 0, %s92
      %s93 = sphi 0, %s90
      %s94 = sphi 0, %s93
      %s110 = sphi 0, %s94
    $region4: #{tpu_custom_call.1} parent=1 // loop_header_branch
      %15 = sbr.rel (%p13) target = $region8
    $region5: #{tpu_custom_call.1} parent=1 // loop_body
      %s17 = ssub.s32 %s12, 1
      %s18 = ssub.s32 %s12, 2
      %s19 = sadd.s32 %s12, 1
      %s20 = ssub.s32 %s12, %s19
      %p21 = scmp.eq.s32.totalorder %s20, 0
      %s23 = sadd.s32 %s22, 1
      %s24 = scalar_select %p21, %s22, %s23
      %p27 = pneg %p21
      %p28 = scmp.eq.s32.totalorder %s12, 1
      %p29 = por %p27, %p28
      %p30 = scmp.ne.s32.totalorder %s22, %s25
      %p31 = scmp.eq.s32.totalorder %s12, 0
      %p32 = por %p30, %p31
      %p33 = scmp.ne.s32.totalorder %s22, %s25
      %p34 = scmp.eq.s32.totalorder %s17, 1
      %p35 = por %p33, %p34
      %p36 = scmp.ne.s32.totalorder %s25, %s26
      %p37 = scmp.eq.s32.totalorder %s17, 0
      %p38 = por %p36, %p37
      %p39 = scmp.ne.s32.totalorder %s25, %s26
      %p40 = scmp.eq.s32.totalorder %s18, 1
      %p41 = por %p39, %p40
      %p43 = scmp.ne.s32.totalorder %s26, %s42
      %p44 = scmp.eq.s32.totalorder %s18, 0
      %p45 = por %p43, %p44
      %s47 = sadd.s32 %s46, 1
      %p50 = scmp.eq.s32.totalorder %s12, 1
      %p51 = scmp.ne.s32.totalorder %s46, %s48
      %p52 = scmp.eq.s32.totalorder %s12, 0
      %p53 = por %p51, %p52
      %p54 = scmp.ne.s32.totalorder %s46, %s48
      %p55 = scmp.eq.s32.totalorder %s17, 1
      %p56 = por %p54, %p55
      %p57 = scmp.ne.s32.totalorder %s48, %s49
      %p58 = scmp.eq.s32.totalorder %s17, 0
      %p59 = por %p57, %p58
      %p60 = scmp.ne.s32.totalorder %s48, %s49
      %p61 = scmp.eq.s32.totalorder %s18, 1
      %p62 = por %p60, %p61
      %p64 = scmp.ne.s32.totalorder %s49, %s63
      %p65 = scmp.eq.s32.totalorder %s18, 0
      %p66 = por %p64, %p65
      %s68 = sadd.s32 %s67, 1
      %p71 = scmp.eq.s32.totalorder %s12, 1
      %p72 = scmp.ne.s32.totalorder %s67, %s69
      %p73 = scmp.eq.s32.totalorder %s12, 0
      %p74 = por %p72, %p73
      %p75 = scmp.ne.s32.totalorder %s67, %s69
      %p76 = scmp.eq.s32.totalorder %s17, 1
      %p77 = por %p75, %p76
      %p78 = scmp.ne.s32.totalorder %s69, %s70
      %p79 = scmp.eq.s32.totalorder %s17, 0
      %p80 = por %p78, %p79
      %p81 = scmp.ne.s32.totalorder %s69, %s70
      %p82 = scmp.eq.s32.totalorder %s18, 1
      %p83 = por %p81, %p82
      %p85 = scmp.ne.s32.totalorder %s70, %s84
      %p86 = scmp.eq.s32.totalorder %s18, 0
      %p87 = por %p85, %p86
      %s88 = ssub.s32 %s12, %s19
      %p89 = scmp.eq.s32.totalorder %s88, 0
      %s91 = sadd.s32 %s90, 1
      %s92 = scalar_select %p89, %s90, %s91
      %p95 = pneg %p89
      %p96 = scmp.eq.s32.totalorder %s12, 1
      %p97 = por %p95, %p96
      %p98 = scmp.ne.s32.totalorder %s90, %s93
      %p99 = scmp.eq.s32.totalorder %s12, 0
      %p100 = por %p98, %p99
      %p101 = scmp.ne.s32.totalorder %s90, %s93
      %p102 = scmp.eq.s32.totalorder %s17, 1
      %p103 = por %p101, %p102
      %p104 = scmp.ne.s32.totalorder %s93, %s94
      %p105 = scmp.eq.s32.totalorder %s17, 0
      %p106 = por %p104, %p105
      %p107 = scmp.ne.s32.totalorder %s93, %s94
      %p108 = scmp.eq.s32.totalorder %s18, 1
      %p109 = por %p107, %p108
      %p111 = scmp.ne.s32.totalorder %s94, %s110
      %p112 = scmp.eq.s32.totalorder %s18, 0
      %p113 = por %p111, %p112
      %p114 = scmp.le.s32.totalorder 1, %s12
      %p115 = scmp.lt.s32.totalorder %s12, 3
      %p116 = pnand %p114, %p115
      %p117 = pneg %p116
      // Predicated region
      $region9: #{tpu_custom_call.1} parent=5 // pred_check
        _
      $region10: #{tpu_custom_call.1} parent=5 // pred_check_branch
        %119 = sbr.rel (%p116) target = $region12
      $region11: #{tpu_custom_call.1} parent=5 // pred_region
        %s120 = ssub.s32 %s12, 1
        // Predicated region
        $region13: #{tpu_custom_call.1} parent=11 // pred_check
          %p121 = pneg %p59
        $region14: #{tpu_custom_call.1} parent=11 // pred_check_branch
          %123 = sbr.rel (%p121) target = $region16
        $region15: #{tpu_custom_call.1} parent=11 // pred_region
          _
        $region16: #{tpu_custom_call.1} parent=11 // pred_fallthru
          _
        // Predicated region
        $region17: #{tpu_custom_call.1} parent=11 // pred_check
          %p124 = pneg %p80
        $region18: #{tpu_custom_call.1} parent=11 // pred_check_branch
          %126 = sbr.rel (%p124) target = $region20
        $region19: #{tpu_custom_call.1} parent=11 // pred_region
          _
        $region20: #{tpu_custom_call.1} parent=11 // pred_fallthru
          _
      $region12: #{tpu_custom_call.1} parent=5 // pred_fallthru
        _
      %p127 = scmp.lt.s32.totalorder %s12, 2
      // Predicated region
      $region21: #{tpu_custom_call.1} parent=5 // pred_check
        %p128 = pneg %p127
      $region22: #{tpu_custom_call.1} parent=5 // pred_check_branch
        %130 = sbr.rel (%p128) target = $region24
      $region23: #{tpu_custom_call.1} parent=5 // pred_region
        // Predicated region
        $region25: #{tpu_custom_call.1} parent=23 // pred_check
          %p131 = pneg %p32
        $region26: #{tpu_custom_call.1} parent=23 // pred_check_branch
          %133 = sbr.rel (%p131) target = $region28
        $region27: #{tpu_custom_call.1} parent=23 // pred_region
          %s134 = smul.u32 16, %s12
          %p135 = scmp.lt.s32.totalorder %s134, 31
          %s136 = scalar_select %p135, %s134, 31
          %s137 = smul.addr %s136, 3
          %s138 = smul.addr %s137, 4
          %s139 = scalar_lea.vmem %s0, %s138
          %s140 = smul.u32 16, %s12
        $region28: #{tpu_custom_call.1} parent=23 // pred_fallthru
          _
      $region24: #{tpu_custom_call.1} parent=5 // pred_fallthru
        _
      %p141 = scmp.le.s32.totalorder 1, %s12
      %p142 = scmp.lt.s32.totalorder %s12, 3
      %p143 = pnand %p141, %p142
      %p144 = pneg %p143
      // Predicated region
      $region29: #{tpu_custom_call.1} parent=5 // pred_check
        _
      $region30: #{tpu_custom_call.1} parent=5 // pred_check_branch
        %146 = sbr.rel (%p143) target = $region32
      $region31: #{tpu_custom_call.1} parent=5 // pred_region
        %s147 = ssub.s32 %s12, 1
        %s148 = smul.u32 16, %s17
        %p149 = scmp.lt.s32.totalorder %s148, 31
        %s150 = scalar_select %p149, %s148, 31
        %s151 = smul.addr %s150, 3
        %s152 = smul.addr %s151, 4
        %s153 = scalar_lea.vmem %s0, %s152
        %p154 = pneg %p38
        %p155 = pneg %p35
        %p156 = pneg %p59
        %p157 = pneg %p56
        %p158 = pneg %p80
        %p159 = pneg %p77
        %p160 = pneg %p106
        %p161 = pneg %p103
        %s162 = sand.u32 %s93, 1
        %s163 = scalar_lea.sflag [#allocation3], %s162
        %s164 = sand.u32 %s93, 1
        %s165 = smul.addr %s164, 128
        %s166 = scalar_lea.vmem [#allocation2], %s165
        %s167 = smul.u32 16, %s17
        %p168 = scmp.lt.s32.totalorder %s167, 31
        %s169 = scalar_select %p168, %s167, 31
        %s170 = smul.addr %s169, 3
        %s171 = smul.addr %s170, 4
        %s172 = scalar_lea.vmem %s0, %s171
        %s173 = smul.u32 16, %s17
        %s174 = smul.u32 16, %s17
        %v176 = vld [vmem:[%s172] sm:$0xff]
        %v177 = vld [vmem:[%s172 + $0x8] sm:$0xf]
        %v178 = vld [vmem:[%s172 + $0xc] sm:$0xff]
        %v179 = vld [vmem:[%s172 + $0x14] sm:$0xf]
        %v180 = vld [vmem:[%s172 + $0x18] sm:$0xff]
        %v181 = vld [vmem:[%s172 + $0x20] sm:$0xf]
        %v182 = vld [vmem:[%s172 + $0x24] sm:$0xff]
        %v183 = vld [vmem:[%s172 + $0x2c] sm:$0xf]
        %v184 = vld [vmem:[%s172 + $0x30] sm:$0xff]
        %v185 = vld [vmem:[%s172 + $0x38] sm:$0xf]
        %v186 = vld [vmem:[%s172 + $0x3c] sm:$0xff]
        %v187 = vld [vmem:[%s172 + $0x44] sm:$0xf]
        %v188 = vld [vmem:[%s172 + $0x48] sm:$0xff]
        %v189 = vld [vmem:[%s172 + $0x50] sm:$0xf]
        %v190 = vld [vmem:[%s172 + $0x54] sm:$0xff]
        %v191 = vld [vmem:[%s172 + $0x5c] sm:$0xf]
        %v192 = vld [vmem:[%s172 + $0x60] sm:$0xff]
        %v193 = vld [vmem:[%s172 + $0x68] sm:$0xf]
        %v194 = vld [vmem:[%s172 + $0x6c] sm:$0xff]
        %v195 = vld [vmem:[%s172 + $0x74] sm:$0xf]
        %v196 = vld [vmem:[%s172 + $0x78] sm:$0xff]
        %v197 = vld [vmem:[%s172 + $0x80] sm:$0xf]
        %v198 = vld [vmem:[%s172 + $0x84] sm:$0xff]
        %v199 = vld [vmem:[%s172 + $0x8c] sm:$0xf]
        %v200 = vld [vmem:[%s172 + $0x90] sm:$0xff]
        %v201 = vld [vmem:[%s172 + $0x98] sm:$0xf]
        %v202 = vld [vmem:[%s172 + $0x9c] sm:$0xff]
        %v203 = vld [vmem:[%s172 + $0xa4] sm:$0xf]
        %v204 = vld [vmem:[%s172 + $0xa8] sm:$0xff]
        %v205 = vld [vmem:[%s172 + $0xb0] sm:$0xf]
        %v206 = vld [vmem:[%s172 + $0xb4] sm:$0xff]
        %v207 = vld [vmem:[%s172 + $0xbc] sm:$0xf]
        %v208 = vld [vmem:[%s1] sm:$0xf]
        %v209 = vld [vmem:[%s1 + $0x4] sm:$0xf]
        %v210 = vld [vmem:[%s1 + $0x8] sm:$0xf]
        %v211 = vld [vmem:[%s1 + $0xc] sm:$0xf]
        %v212 = vld [vmem:[%s1 + $0x10] sm:$0xf]
        %v213 = vld [vmem:[%s1 + $0x14] sm:$0xf]
        %v214 = vld [vmem:[%s1 + $0x18] sm:$0xf]
        %v215 = vld [vmem:[%s1 + $0x1c] sm:$0xf]
        %v216 = vld [vmem:[%s1 + $0x20] sm:$0xf]
        %v217 = vld [vmem:[%s1 + $0x24] sm:$0xf]
        %v218 = vld [vmem:[%s1 + $0x28] sm:$0xf]
        %v219 = vld [vmem:[%s1 + $0x2c] sm:$0xf]
        %v220 = vld [vmem:[%s1 + $0x30] sm:$0xf]
        %v221 = vld [vmem:[%s1 + $0x34] sm:$0xf]
        %v222 = vld [vmem:[%s1 + $0x38] sm:$0xf]
        %v223 = vld [vmem:[%s1 + $0x3c] sm:$0xf]
        %v224 = vld [vmem:[%s1 + $0x40] sm:$0xf]
        %v225 = vld [vmem:[%s1 + $0x44] sm:$0xf]
        %v226 = vld [vmem:[%s1 + $0x48] sm:$0xf]
        %v227 = vld [vmem:[%s1 + $0x4c] sm:$0xf]
        %v228 = vld [vmem:[%s1 + $0x50] sm:$0xf]
        %v229 = vld [vmem:[%s1 + $0x54] sm:$0xf]
        %v230 = vld [vmem:[%s1 + $0x58] sm:$0xf]
        %v231 = vld [vmem:[%s1 + $0x5c] sm:$0xf]
        %v232 = vld [vmem:[%s1 + $0x60] sm:$0xf]
        %v233 = vld [vmem:[%s1 + $0x64] sm:$0xf]
        %v234 = vld [vmem:[%s1 + $0x68] sm:$0xf]
        %v235 = vld [vmem:[%s1 + $0x6c] sm:$0xf]
        %v236 = vld [vmem:[%s1 + $0x70] sm:$0xf]
        %v237 = vld [vmem:[%s1 + $0x74] sm:$0xf]
        %v238 = vld [vmem:[%s1 + $0x78] sm:$0xf]
        %v239 = vld [vmem:[%s1 + $0x7c] sm:$0xf]
        %v240 = vld [vmem:[%s1 + $0x80] sm:$0xf]
        %v241 = vld [vmem:[%s1 + $0x84] sm:$0xf]
        %v242 = vld [vmem:[%s1 + $0x88] sm:$0xf]
        %v243 = vld [vmem:[%s1 + $0x8c] sm:$0xf]
        %v244 = vld [vmem:[%s1 + $0x90] sm:$0x7]
        %v245 = vld [vmem:[%s2] sm:$0x1]
        %v247 = vlaneseq
        %v248 = vshrl.u32 %v247, 7
        %v249 = vsub.s32 0, %v248
        %v250 = vrot.slane %v245, %v249
        %v284 = vunpack.c.l.b16 %v176
        %v285 = vunpack.c.h.b16 %v176
        %v286 = vunpack.c.l.b16 %v177
        %v287 = vunpack.c.l.b16 %v178
        %v288 = vunpack.c.h.b16 %v178
        %v289 = vunpack.c.l.b16 %v179
        %v290 = vunpack.c.l.b16 %v180
        %v291 = vunpack.c.h.b16 %v180
        %v292 = vunpack.c.l.b16 %v181
        %v293 = vunpack.c.l.b16 %v182
        %v294 = vunpack.c.h.b16 %v182
        %v295 = vunpack.c.l.b16 %v183
        %v296 = vunpack.c.l.b16 %v184
        %v297 = vunpack.c.h.b16 %v184
        %v298 = vunpack.c.l.b16 %v185
        %v299 = vunpack.c.l.b16 %v186
        %v300 = vunpack.c.h.b16 %v186
        %v301 = vunpack.c.l.b16 %v187
        %v302 = vunpack.c.l.b16 %v188
        %v303 = vunpack.c.h.b16 %v188
        %v304 = vunpack.c.l.b16 %v189
        %v305 = vunpack.c.l.b16 %v190
        %v306 = vunpack.c.h.b16 %v190
        %v307 = vunpack.c.l.b16 %v191
        %v308 = vunpack.c.l.b16 %v192
        %v309 = vunpack.c.h.b16 %v192
        %v310 = vunpack.c.l.b16 %v193
        %v311 = vunpack.c.l.b16 %v194
        %v312 = vunpack.c.h.b16 %v194
        %v313 = vunpack.c.l.b16 %v195
        %v314 = vunpack.c.l.b16 %v196
        %v315 = vunpack.c.h.b16 %v196
        %v316 = vunpack.c.l.b16 %v197
        %v317 = vunpack.c.l.b16 %v198
        %v318 = vunpack.c.h.b16 %v198
        %v319 = vunpack.c.l.b16 %v199
        %v320 = vunpack.c.l.b16 %v200
        %v321 = vunpack.c.h.b16 %v200
        %v322 = vunpack.c.l.b16 %v201
        %v323 = vunpack.c.l.b16 %v202
        %v324 = vunpack.c.h.b16 %v202
        %v325 = vunpack.c.l.b16 %v203
        %v326 = vunpack.c.l.b16 %v204
        %v327 = vunpack.c.h.b16 %v204
        %v328 = vunpack.c.l.b16 %v205
        %v329 = vunpack.c.l.b16 %v206
        %v330 = vunpack.c.h.b16 %v206
        %v331 = vunpack.c.l.b16 %v207
        %v332 = vpack.c.b16 %v287, %v284
        %v333 = vpack.c.b16 %v288, %v285
        %v334 = vpack.c.b16 %v289, %v286
        %v335 = vpack.c.b16 %v293, %v290
        %v336 = vpack.c.b16 %v294, %v291
        %v337 = vpack.c.b16 %v295, %v292
        %v338 = vpack.c.b16 %v299, %v296
        %v339 = vpack.c.b16 %v300, %v297
        %v340 = vpack.c.b16 %v301, %v298
        %v341 = vpack.c.b16 %v305, %v302
        %v342 = vpack.c.b16 %v306, %v303
        %v343 = vpack.c.b16 %v307, %v304
        %v344 = vpack.c.b16 %v311, %v308
        %v345 = vpack.c.b16 %v312, %v309
        %v346 = vpack.c.b16 %v313, %v310
        %v347 = vpack.c.b16 %v317, %v314
        %v348 = vpack.c.b16 %v318, %v315
        %v349 = vpack.c.b16 %v319, %v316
        %v350 = vpack.c.b16 %v323, %v320
        %v351 = vpack.c.b16 %v324, %v321
        %v352 = vpack.c.b16 %v325, %v322
        %v353 = vpack.c.b16 %v329, %v326
        %v354 = vpack.c.b16 %v330, %v327
        %v355 = vpack.c.b16 %v331, %v328
        %v409 = vunpack.c.l.b16 %v208
        %v410 = vunpack.c.l.b16 %v209
        %v411 = vunpack.c.l.b16 %v210
        %v412 = vunpack.c.l.b16 %v211
        %v413 = vunpack.c.l.b16 %v212
        %v414 = vunpack.c.l.b16 %v213
        %v415 = vunpack.c.l.b16 %v214
        %v416 = vunpack.c.l.b16 %v215
        %v417 = vunpack.c.l.b16 %v216
        %v418 = vunpack.c.l.b16 %v217
        %v419 = vunpack.c.l.b16 %v218
        %v420 = vunpack.c.l.b16 %v219
        %v421 = vunpack.c.l.b16 %v220
        %v422 = vunpack.c.l.b16 %v221
        %v423 = vunpack.c.l.b16 %v222
        %v424 = vunpack.c.l.b16 %v223
        %v425 = vunpack.c.l.b16 %v224
        %v426 = vunpack.c.l.b16 %v225
        %v427 = vunpack.c.l.b16 %v226
        %v428 = vunpack.c.l.b16 %v227
        %v429 = vunpack.c.l.b16 %v228
        %v430 = vunpack.c.l.b16 %v229
        %v431 = vunpack.c.l.b16 %v230
        %v432 = vunpack.c.l.b16 %v231
        %v433 = vunpack.c.l.b16 %v232
        %v434 = vunpack.c.l.b16 %v233
        %v435 = vunpack.c.l.b16 %v234
        %v436 = vunpack.c.l.b16 %v235
        %v437 = vunpack.c.l.b16 %v236
        %v438 = vunpack.c.l.b16 %v237
        %v439 = vunpack.c.l.b16 %v238
        %v440 = vunpack.c.l.b16 %v239
        %v441 = vunpack.c.l.b16 %v240
        %v442 = vunpack.c.l.b16 %v241
        %v443 = vunpack.c.l.b16 %v242
        %v444 = vunpack.c.l.b16 %v243
        %v445 = vunpack.c.l.b16 %v244
        %v446 = vpack.c.b16 %v410, %v409
        %v447 = vpack.c.b16 %v412, %v411
        %v448 = vpack.c.b16 %v414, %v413
        %v449 = vpack.c.b16 %v416, %v415
        %v450 = vpack.c.b16 %v418, %v417
        %v451 = vpack.c.b16 %v420, %v419
        %v452 = vpack.c.b16 %v422, %v421
        %v453 = vpack.c.b16 %v424, %v423
        %v454 = vpack.c.b16 %v426, %v425
        %v455 = vpack.c.b16 %v428, %v427
        %v456 = vpack.c.b16 %v430, %v429
        %v457 = vpack.c.b16 %v432, %v431
        %v458 = vpack.c.b16 %v434, %v433
        %v459 = vpack.c.b16 %v436, %v435
        %v460 = vpack.c.b16 %v438, %v437
        %v461 = vpack.c.b16 %v440, %v439
        %v462 = vpack.c.b16 %v442, %v441
        %v463 = vpack.c.b16 %v444, %v443
        %v464 = vpack.c.b16 %v445, %v445
        %vm483 = vcmask 310272
        %v485 = vsel %vm483, %v334, 0
        %v488 = vsel %vm483, %v337, 0
        %v491 = vsel %vm483, %v340, 0
        %v494 = vsel %vm483, %v343, 0
        %v497 = vsel %vm483, %v346, 0
        %v500 = vsel %vm483, %v349, 0
        %v503 = vsel %vm483, %v352, 0
        %v506 = vsel %vm483, %v355, 0
        %vm508 = vcmask 1042432
        %v510 = vsel %vm508, %v464, 0
        %512 = vmatprep.subr.bf16.mxu0 0
        %513 = vmatpush1.bf16.msra.mxu0 %v446
        %514 = vmatprep.subr.bf16.mxu0 0
        %515 = vmatpush1.bf16.msra.mxu0 %v447
        %516 = vmatprep.subr.bf16.mxu0 0
        %517 = vmatpush1.bf16.msra.mxu0 %v448
        %518 = vmatprep.subr.bf16.mxu0 0
        %519 = vmatpush1.bf16.msra.mxu0 %v449
        %520 = vmatprep.subr.bf16.mxu0 0
        %521 = vmatpush1.bf16.msra.mxu0 %v450
        %522 = vmatprep.subr.bf16.mxu0 0
        %523 = vmatpush1.bf16.msra.mxu0 %v451
        %524 = vmatprep.subr.bf16.mxu0 0
        %525 = vmatpush1.bf16.msra.mxu0 %v452
        %526 = vmatprep.subr.bf16.mxu0 0
        %527 = vmatpush1.bf16.msra.mxu0 %v453
        %528 = vmatprep.subr.bf16.mxu0 0
        %529 = vmatpush1.bf16.msra.mxu0 %v454
        %530 = vmatprep.subr.bf16.mxu0 0
        %531 = vmatpush1.bf16.msra.mxu0 %v455
        %532 = vmatprep.subr.bf16.mxu0 0
        %533 = vmatpush1.bf16.msra.mxu0 %v456
        %534 = vmatprep.subr.bf16.mxu0 0
        %535 = vmatpush1.bf16.msra.mxu0 %v457
        %536 = vmatprep.subr.bf16.mxu0 0
        %537 = vmatpush1.bf16.msra.mxu0 %v458
        %538 = vmatprep.subr.bf16.mxu0 0
        %539 = vmatpush1.bf16.msra.mxu0 %v459
        %540 = vmatprep.subr.bf16.mxu0 0
        %541 = vmatpush1.bf16.msra.mxu0 %v460
        %542 = vmatprep.subr.bf16.mxu0 0
        %543 = vmatpush1.bf16.msra.mxu0 %v461
        %544 = vmatprep.mubr.bf16.mxu0 %v333
        %545 = vmatmul.mubr.bf16.gmra.mrb[0].mxu0 %v332
        %v546 = vpop.f32.mrb[0].mxu0
        %v547 = vadd.f32 %v250, %v546
        %v548 = vpop.f32.mrb[0].mxu0
        %v549 = vpop.f32.mrb[0].mxu0
        %v550 = vadd.f32 %v250, %v549
        %v551 = vpop.f32.mrb[0].mxu0
        %552 = vmatprep.mubr.bf16.mxu0 %v336
        %553 = vmatmul.mubr.bf16.gmra.mrb[0].mxu0 %v335
        %v554 = vpop.f32.mrb[0].mxu0
        %v555 = vadd.f32 %v250, %v554
        %v556 = vpop.f32.mrb[0].mxu0
        %v557 = vpop.f32.mrb[0].mxu0
        %v558 = vadd.f32 %v250, %v557
        %v559 = vpop.f32.mrb[0].mxu0
        %560 = vmatprep.mubr.bf16.mxu0 %v339
        %561 = vmatmul.mubr.bf16.gmra.mrb[0].mxu0 %v338
        %v562 = vpop.f32.mrb[0].mxu0
        %v563 = vadd.f32 %v250, %v562
        %v564 = vpop.f32.mrb[0].mxu0
        %v565 = vpop.f32.mrb[0].mxu0
        %v566 = vadd.f32 %v250, %v565
        %v567 = vpop.f32.mrb[0].mxu0
        %568 = vmatprep.mubr.bf16.mxu0 %v342
        %569 = vmatmul.mubr.bf16.gmra.mrb[0].mxu0 %v341
        %v570 = vpop.f32.mrb[0].mxu0
        %v571 = vadd.f32 %v250, %v570
        %v572 = vpop.f32.mrb[0].mxu0
        %v573 = vpop.f32.mrb[0].mxu0
        %v574 = vadd.f32 %v250, %v573
        %v575 = vpop.f32.mrb[0].mxu0
        %576 = vmatprep.mubr.bf16.mxu0 %v345
        %577 = vmatmul.mubr.bf16.gmra.mrb[0].mxu0 %v344
        %v578 = vpop.f32.mrb[0].mxu0
        %v579 = vadd.f32 %v250, %v578
        %v580 = vpop.f32.mrb[0].mxu0
        %v581 = vpop.f32.mrb[0].mxu0
        %v582 = vadd.f32 %v250, %v581
        %v583 = vpop.f32.mrb[0].mxu0
        %584 = vmatprep.mubr.bf16.mxu0 %v348
        %585 = vmatmul.mubr.bf16.gmra.mrb[0].mxu0 %v347
        %v586 = vpop.f32.mrb[0].mxu0
        %v587 = vadd.f32 %v250, %v586
        %v588 = vpop.f32.mrb[0].mxu0
        %v589 = vpop.f32.mrb[0].mxu0
        %v590 = vadd.f32 %v250, %v589
        %v591 = vpop.f32.mrb[0].mxu0
        %592 = vmatprep.mubr.bf16.mxu0 %v351
        %593 = vmatmul.mubr.bf16.gmra.mrb[0].mxu0 %v350
        %v594 = vpop.f32.mrb[0].mxu0
        %v595 = vadd.f32 %v250, %v594
        %v596 = vpop.f32.mrb[0].mxu0
        %v597 = vpop.f32.mrb[0].mxu0
        %v598 = vadd.f32 %v250, %v597
        %v599 = vpop.f32.mrb[0].mxu0
        %600 = vmatprep.mubr.bf16.mxu0 %v354
        %601 = vmatmul.mubr.bf16.gmra.mrb[0].mxu0 %v353
        %v602 = vpop.f32.mrb[0].mxu0
        %v603 = vadd.f32 %v250, %v602
        %v604 = vpop.f32.mrb[0].mxu0
        %v605 = vpop.f32.mrb[0].mxu0
        %v606 = vadd.f32 %v250, %v605
        %v607 = vpop.f32.mrb[0].mxu0
        %608 = vdwg.mxu0
        %609 = vmatprep.subr.bf16.mxu0 0
        %610 = vmatpush1.bf16.msra.mxu0 %v462
        %611 = vmatprep.subr.bf16.mxu0 0
        %612 = vmatpush1.bf16.msra.mxu0 %v463
        %613 = vmatprep.subr.bf16.mxu0 0
        %614 = vmatpush1.bf16.msra.mxu0 %v510
        %615 = vmatprep.subr.bf16.mxu0 0
        %616 = vmatpush1.bf16.msra.mxu0 0
        %617 = vmatprep.subr.bf16.mxu0 0
        %618 = vmatpush1.bf16.msra.mxu0 0
        %619 = vmatprep.subr.bf16.mxu0 0
        %620 = vmatpush1.bf16.msra.mxu0 0
        %621 = vmatprep.subr.bf16.mxu0 0
        %622 = vmatpush1.bf16.msra.mxu0 0
        %623 = vmatprep.subr.bf16.mxu0 0
        %624 = vmatpush1.bf16.msra.mxu0 0
        %625 = vmatprep.subr.bf16.mxu0 0
        %626 = vmatpush1.bf16.msra.mxu0 0
        %627 = vmatprep.subr.bf16.mxu0 0
        %628 = vmatpush1.bf16.msra.mxu0 0
        %629 = vmatprep.subr.bf16.mxu0 0
        %630 = vmatpush1.bf16.msra.mxu0 0
        %631 = vmatprep.subr.bf16.mxu0 0
        %632 = vmatpush1.bf16.msra.mxu0 0
        %633 = vmatprep.subr.bf16.mxu0 0
        %634 = vmatpush1.bf16.msra.mxu0 0
        %635 = vmatprep.subr.bf16.mxu0 0
        %636 = vmatpush1.bf16.msra.mxu0 0
        %637 = vmatprep.subr.bf16.mxu0 0
        %638 = vmatpush1.bf16.msra.mxu0 0
        %639 = vmatprep.subr.bf16.mxu0 0
        %640 = vmatpush1.bf16.msra.mxu0 0
        %641 = vmatprep.mubr.bf16.mxu0 0
        %642 = vmatmul.mubr.bf16.gmra.mrb[0].mxu0 %v485
        %v643 = vpop.f32.mrb[0].mxu0
        %v644 = vadd.f32 %v547, %v643
        %v645 = vpop.f32.mrb[0].mxu0
        %v646 = vpop.f32.mrb[0].mxu0
        %v647 = vadd.f32 %v550, %v646
        %v648 = vpop.f32.mrb[0].mxu0
        %649 = vmatprep.mubr.bf16.mxu0 0
        %650 = vmatmul.mubr.bf16.gmra.mrb[0].mxu0 %v488
        %v651 = vpop.f32.mrb[0].mxu0
        %v652 = vadd.f32 %v555, %v651
        %v653 = vpop.f32.mrb[0].mxu0
        %v654 = vpop.f32.mrb[0].mxu0
        %v655 = vadd.f32 %v558, %v654
        %v656 = vpop.f32.mrb[0].mxu0
        %657 = vmatprep.mubr.bf16.mxu0 0
        %658 = vmatmul.mubr.bf16.gmra.mrb[0].mxu0 %v491
        %v659 = vpop.f32.mrb[0].mxu0
        %v660 = vadd.f32 %v563, %v659
        %v661 = vpop.f32.mrb[0].mxu0
        %v662 = vpop.f32.mrb[0].mxu0
        %v663 = vadd.f32 %v566, %v662
        %v664 = vpop.f32.mrb[0].mxu0
        %665 = vmatprep.mubr.bf16.mxu0 0
        %666 = vmatmul.mubr.bf16.gmra.mrb[0].mxu0 %v494
        %v667 = vpop.f32.mrb[0].mxu0
        %v668 = vadd.f32 %v571, %v667
        %v669 = vpop.f32.mrb[0].mxu0
        %v670 = vpop.f32.mrb[0].mxu0
        %v671 = vadd.f32 %v574, %v670
        %v672 = vpop.f32.mrb[0].mxu0
        %673 = vmatprep.mubr.bf16.mxu0 0
        %674 = vmatmul.mubr.bf16.gmra.mrb[0].mxu0 %v497
        %v675 = vpop.f32.mrb[0].mxu0
        %v676 = vadd.f32 %v579, %v675
        %v677 = vpop.f32.mrb[0].mxu0
        %v678 = vpop.f32.mrb[0].mxu0
        %v679 = vadd.f32 %v582, %v678
        %v680 = vpop.f32.mrb[0].mxu0
        %681 = vmatprep.mubr.bf16.mxu0 0
        %682 = vmatmul.mubr.bf16.gmra.mrb[0].mxu0 %v500
        %v683 = vpop.f32.mrb[0].mxu0
        %v684 = vadd.f32 %v587, %v683
        %v685 = vpop.f32.mrb[0].mxu0
        %v686 = vpop.f32.mrb[0].mxu0
        %v687 = vadd.f32 %v590, %v686
        %v688 = vpop.f32.mrb[0].mxu0
        %689 = vmatprep.mubr.bf16.mxu0 0
        %690 = vmatmul.mubr.bf16.gmra.mrb[0].mxu0 %v503
        %v691 = vpop.f32.mrb[0].mxu0
        %v692 = vadd.f32 %v595, %v691
        %v693 = vpop.f32.mrb[0].mxu0
        %v694 = vpop.f32.mrb[0].mxu0
        %v695 = vadd.f32 %v598, %v694
        %v696 = vpop.f32.mrb[0].mxu0
        %697 = vmatprep.mubr.bf16.mxu0 0
        %698 = vmatmul.mubr.bf16.gmra.mrb[0].mxu0 %v506
        %v699 = vpop.f32.mrb[0].mxu0
        %v700 = vadd.f32 %v603, %v699
        %v701 = vpop.f32.mrb[0].mxu0
        %v702 = vpop.f32.mrb[0].mxu0
        %v703 = vadd.f32 %v606, %v702
        %v704 = vpop.f32.mrb[0].mxu0
        %705 = vdwg.mxu0
        %v706 = vmax.f32 %v644, 0.0
        %v707 = vmax.f32 %v647, 0.0
        %v708 = vmax.f32 %v652, 0.0
        %v709 = vmax.f32 %v655, 0.0
        %v710 = vmax.f32 %v660, 0.0
        %v711 = vmax.f32 %v663, 0.0
        %v712 = vmax.f32 %v668, 0.0
        %v713 = vmax.f32 %v671, 0.0
        %v714 = vmax.f32 %v676, 0.0
        %v715 = vmax.f32 %v679, 0.0
        %v716 = vmax.f32 %v684, 0.0
        %v717 = vmax.f32 %v687, 0.0
        %v718 = vmax.f32 %v692, 0.0
        %v719 = vmax.f32 %v695, 0.0
        %v720 = vmax.f32 %v700, 0.0
        %v721 = vmax.f32 %v703, 0.0
        %722 = vst [vmem:[%s166] sm:$0xff] %v706
        %723 = vst [vmem:[%s166 + $0x8] sm:$0xff] %v707
        %724 = vst [vmem:[%s166 + $0x10] sm:$0xff] %v708
        %725 = vst [vmem:[%s166 + $0x18] sm:$0xff] %v709
        %726 = vst [vmem:[%s166 + $0x20] sm:$0xff] %v710
        %727 = vst [vmem:[%s166 + $0x28] sm:$0xff] %v711
        %728 = vst [vmem:[%s166 + $0x30] sm:$0xff] %v712
        %729 = vst [vmem:[%s166 + $0x38] sm:$0xff] %v713
        %730 = vst [vmem:[%s166 + $0x40] sm:$0xff] %v714
        %731 = vst [vmem:[%s166 + $0x48] sm:$0xff] %v715
        %732 = vst [vmem:[%s166 + $0x50] sm:$0xff] %v716
        %733 = vst [vmem:[%s166 + $0x58] sm:$0xff] %v717
        %734 = vst [vmem:[%s166 + $0x60] sm:$0xff] %v718
        %735 = vst [vmem:[%s166 + $0x68] sm:$0xff] %v719
        %736 = vst [vmem:[%s166 + $0x70] sm:$0xff] %v720
        %737 = vst [vmem:[%s166 + $0x78] sm:$0xff] %v721
        %s738 = sand.u32 %s93, 1
        %s739 = scalar_lea.sflag [#allocation3], %s738
        %s740 = sand.u32 %s93, 1
        %s741 = smul.addr %s740, 128
        %s742 = scalar_lea.vmem [#allocation2], %s741
        // Predicated region
        $region33: #{tpu_custom_call.1} parent=31 // pred_check
          %p743 = pneg %p103
        $region34: #{tpu_custom_call.1} parent=31 // pred_check_branch
          %745 = sbr.rel (%p743) target = $region36
        $region35: #{tpu_custom_call.1} parent=31 // pred_region
          %s746 = smul.u32 16, %s17
          %s748 = ssub.s32 2048, 2048
          %749 = vsyncadd %s739, %s748
          %s750 = smul.addr %s746, 128
          %s751 = scalar_lea.hbm %s3, %s750
          %s752 = sshll.u32 %s742, 4
          %s753 = int_to_ptr.vmem [resolvable:$true] %s752
          %758 = dma.vmem_to_hbm [thread:$0]  %s753, 2048, %s751, %s739, 128, 128, 8
        $region36: #{tpu_custom_call.1} parent=31 // pred_fallthru
          _
      $region32: #{tpu_custom_call.1} parent=5 // pred_fallthru
        _
      %p759 = scmp.le.s32.totalorder 2, %s12
      // Predicated region
      $region37: #{tpu_custom_call.1} parent=5 // pred_check
        %p760 = pneg %p759
      $region38: #{tpu_custom_call.1} parent=5 // pred_check_branch
        %762 = sbr.rel (%p760) target = $region40
      $region39: #{tpu_custom_call.1} parent=5 // pred_region
        %s763 = ssub.s32 %s12, 2
        // Predicated region
        $region41: #{tpu_custom_call.1} parent=39 // pred_check
          %p764 = pneg %p109
        $region42: #{tpu_custom_call.1} parent=39 // pred_check_branch
          %766 = sbr.rel (%p764) target = $region44
        $region43: #{tpu_custom_call.1} parent=39 // pred_region
          %s767 = sand.u32 %s94, 1
          %s768 = scalar_lea.sflag [#allocation3], %s767
          %s769 = sand.u32 %s94, 1
          %s770 = smul.addr %s769, 128
          %s771 = scalar_lea.vmem [#allocation2], %s770
          %772 = dma.done %s768, 2048
        $region44: #{tpu_custom_call.1} parent=39 // pred_fallthru
          _
      $region40: #{tpu_custom_call.1} parent=5 // pred_fallthru
        _
    $region6: #{tpu_custom_call.1} parent=1 // loop_footer
      %s16 = sadd.s32 1, %s12
    $region7: #{tpu_custom_call.1} parent=1 // loop_footer_branch
      %11 = sbr.rel target = $region3
    $region8: #{tpu_custom_call.1} parent=1 // loop_exit
      _
    %773 = vsyncpa [#allocation3], 1
    %s774 = scalar_lea.sflag [#allocation3], 1
    %775 = vsyncpa %s774, 1

</llo_original>
